<compile_context>
chip_gen: v5e
topology: v5e:2x2
jax: 0.10.0
libtpu: 0.0.40
codegen_flags: <defaults>
</compile_context>

<pallas_src>
import functools
import math

import jax
import jax.numpy as jnp
from jax.experimental import pallas as pl
from jax.experimental.pallas import tpu as pltpu


# Activations supported by get_activation that have a clean elementwise JAX
# equivalent. act(0) need not be 0: padded hidden columns feed zero rows of the
# next (zero-padded) weight, so padding stays mathematically exact.
_ACTIVATIONS = {
    "tanh": jnp.tanh,
    "sigmoid": jax.nn.sigmoid,
    "relu": jax.nn.relu,
    "leakyrelu": lambda x: jax.nn.leaky_relu(x, 0.01),
    "elu": jax.nn.elu,
    "selu": jax.nn.selu,
    "celu": jax.nn.celu,
    "gelu": jax.nn.gelu,
    "silu": jax.nn.silu,
    "mish": lambda x: x * jnp.tanh(jax.nn.softplus(x)),
}
# TODO(synk): PReLU/RReLU (learned/random slope) and GLU (changes feature dim)
# are not implemented in this fused kernel.


def _round_up(x, m):
    return ((x + m - 1) // m) * m


def _fnn_kernel(num_layers, act_fn, compute_dtype, x_ref, *refs):
    """Fused MLP forward over one batch tile.

    refs = (w0, b0, w1, b1, ..., w_{L-1}, b_{L-1}, out_ref)
    Hidden layers apply act_fn; the last layer is linear, matching FNN.forward.
    Matmul inputs are in compute_dtype (f32 or bf16); accumulation and the
    activation are always f32 (EUP has no bf16 path on v5e).
    """
    out_ref = refs[-1]
    param_refs = refs[:-1]

    h = x_ref[...].astype(compute_dtype)        # (TB, D0_pad)
    for li in range(num_layers):
        w = param_refs[2 * li][...]             # (Dl_pad, Dl1_pad) compute_dtype
        b = param_refs[2 * li + 1][...]         # (1, Dl1_pad) float32
        h32 = jnp.dot(h, w, preferred_element_type=jnp.float32) + b
        if li < num_layers - 1:
            h32 = act_fn(h32)                   # EUP/VPU, overlaps with MXU
            h = h32.astype(compute_dtype)
        else:
            h = h32
    out_ref[...] = h.astype(out_ref.dtype)      # lane-dense (padded) store


def fnn_forward(x, weights, biases, *, activation="tanh", tile_b=None,
                compute_dtype=jnp.float32):
    """Run the fused FNN kernel.

    x:       (N, D_in) float32
    weights: list of (D_l, D_{l+1}) float32  ([in, out] layout)
    biases:  list of (1, D_{l+1}) float32
    """
    n, d_in = x.shape
    num_layers = len(weights)
    d_out = weights[-1].shape[1]
    act_fn = _ACTIVATIONS[activation]

    # ---- Lane-pad all feature dims to multiples of 128 (zero padding). ----
    dims = [d_in] + [w.shape[1] for w in weights]
    pdims = [_round_up(d, 128) for d in dims]

    flat_params = []
    for li, (w, b) in enumerate(zip(weights, biases)):
        wp = jnp.zeros((pdims[li], pdims[li + 1]), dtype=compute_dtype)
        wp = wp.at[: w.shape[0], : w.shape[1]].set(w.astype(compute_dtype))
        bp = jnp.zeros((1, pdims[li + 1]), dtype=jnp.float32)
        bp = bp.at[:, : b.shape[1]].set(b.astype(jnp.float32))
        flat_params.extend([wp, bp])

    # ---- Batch tiling: big tiles; pad N so tile_b is a free choice. ----
    if tile_b is None:
        tile_b = min(512, _round_up(n, 8))
    n_pad = _round_up(n, tile_b)

    xp = jnp.zeros((n_pad, pdims[0]), dtype=jnp.float32)
    xp = xp.at[:n, :d_in].set(x.astype(jnp.float32))

    grid = (n_pad // tile_b,)

    in_specs = [pl.BlockSpec((tile_b, pdims[0]), lambda i: (i, 0))]
    for li in range(num_layers):
        wp = flat_params[2 * li]
        bp = flat_params[2 * li + 1]
        # NOTE: shared `lambda i: (0, 0)` is intentional and safe — it captures
        # no loop variable. Parameters are small and stay resident in VMEM.
        # TODO(synk): if layer widths grow toward VMEM limits (64 MiB on v7x),
        # switch to a streamed K-axis ("arbitrary") with a pl.when accumulator.
        in_specs.append(pl.BlockSpec(wp.shape, lambda i: (0, 0)))
        in_specs.append(pl.BlockSpec(bp.shape, lambda i: (0, 0)))

    out_spec = pl.BlockSpec((tile_b, pdims[-1]), lambda i: (i, 0))

    # ---- Cost estimate (advisory, helps XLA schedule around the call). ----
    flops = 2 * n_pad * sum(pdims[i] * pdims[i + 1] for i in range(num_layers))
    transcendentals = n_pad * sum(pdims[1:-1]) if num_layers > 1 else 0
    bytes_accessed = (
        xp.size * xp.dtype.itemsize
        + sum(a.size * a.dtype.itemsize for a in flat_params)
        + n_pad * pdims[-1] * 4
    )
    cost = pl.CostEstimate(
        flops=flops, transcendentals=transcendentals, bytes_accessed=bytes_accessed
    )

    kernel = functools.partial(_fnn_kernel, num_layers, act_fn, compute_dtype)

    out_padded = pl.pallas_call(
        kernel,
        out_shape=jax.ShapeDtypeStruct((n_pad, pdims[-1]), jnp.float32),
        grid_spec=pltpu.PrefetchScalarGridSpec(
            num_scalar_prefetch=0,
            grid=grid,
            in_specs=in_specs,
            out_specs=out_spec,
        ),
        compiler_params=pltpu.CompilerParams(
            dimension_semantics=("parallel",)   # batch axis; feeds both TCs on v7x
        ),
        cost_estimate=cost,
    )(xp, *flat_params)

    return out_padded[:n, :d_out]


def init_fnn_params(layer_sizes, key):
    """Deterministic xavier_uniform weights ([in, out] layout), zero biases."""
    weights, biases = [], []
    for i in range(len(layer_sizes) - 1):
        fan_in, fan_out = layer_sizes[i], layer_sizes[i + 1]
        key, sub = jax.random.split(key)
        limit = math.sqrt(6.0 / (fan_in + fan_out))
        w = jax.random.uniform(
            sub, (fan_in, fan_out), dtype=jnp.float32, minval=-limit, maxval=limit
        )
        b = jnp.zeros((1, fan_out), dtype=jnp.float32)
        weights.append(w)
        biases.append(b)
    return weights, biases


def fnn_reference(x, weights, biases, activation="tanh"):
    """Plain-JAX reference of FNN.forward (eval mode)."""
    act = _ACTIVATIONS[activation]
    h = x
    for i, (w, b) in enumerate(zip(weights, biases)):
        h = h @ w + b
        if i < len(weights) - 1:
            h = act(h)
    return h


if __name__ == "__main__":
    # FNN(layer_sizes=[16, 32, 64, 8], activation='tanh',
    #     kernel_initializer='xavier_uniform', dropout=0.0)  — eval mode.
    layer_sizes = [16, 32, 64, 8]
    batch = 64

    key = jax.random.PRNGKey(0)
    key, xkey = jax.random.split(key)
    x = jax.random.normal(xkey, (batch, layer_sizes[0]), dtype=jnp.float32)

    weights, biases = init_fnn_params(layer_sizes, key)
    ref = fnn_reference(x, weights, biases, activation="tanh")

    # f32 compute path (exact vs reference).
    out_f32 = fnn_forward(x, weights, biases, activation="tanh",
                          compute_dtype=jnp.float32)
    out_f32 = jax.block_until_ready(out_f32)
    assert out_f32.shape == (batch, layer_sizes[-1])
    assert jnp.allclose(out_f32, ref, atol=1e-5, rtol=1e-5), "f32 mismatch vs reference"

    # bf16 compute path (v6e/v7x MXU peak; f32 accumulation, looser tolerance).
    out_bf16 = fnn_forward(x, weights, biases, activation="tanh",
                           compute_dtype=jnp.bfloat16)
    out_bf16 = jax.block_until_ready(out_bf16)
    assert out_bf16.shape == (batch, layer_sizes[-1])
    assert jnp.allclose(out_bf16, ref, atol=2e-2, rtol=2e-2), "bf16 mismatch vs reference"

    print("KERNEL_OK")
</pallas_src>

<mosaic_0001>
module attributes {stable_mosaic.version = 11 : i64} {
  func.func @_fnn_kernel(%arg0: i32, %arg1: memref<64x128xf32, #tpu.memory_space<vmem>>, %arg2: memref<128x128xf32, #tpu.memory_space<vmem>>, %arg3: memref<1x128xf32, #tpu.memory_space<vmem>>, %arg4: memref<128x128xf32, #tpu.memory_space<vmem>>, %arg5: memref<1x128xf32, #tpu.memory_space<vmem>>, %arg6: memref<128x128xf32, #tpu.memory_space<vmem>>, %arg7: memref<1x128xf32, #tpu.memory_space<vmem>>, %arg8: memref<64x128xf32, #tpu.memory_space<vmem>>) attributes {dimension_semantics = [#tpu.dimension_semantics<parallel>], iteration_bounds = array<i64: 1>, scalar_prefetch = 0 : i64, scratch_operands = 0 : i64, tpu.core_type = #tpu.core_type<tc>, window_params = [{transform_indices = @transform_0, window_bounds = array<i64: 64, 128>}, {pipeline_mode = #tpu.pipeline_mode<synchronous>, transform_indices = @transform_1, window_bounds = array<i64: 128, 128>}, {pipeline_mode = #tpu.pipeline_mode<synchronous>, transform_indices = @transform_2, window_bounds = array<i64: 1, 128>}, {pipeline_mode = #tpu.pipeline_mode<synchronous>, transform_indices = @transform_3, window_bounds = array<i64: 128, 128>}, {pipeline_mode = #tpu.pipeline_mode<synchronous>, transform_indices = @transform_4, window_bounds = array<i64: 1, 128>}, {pipeline_mode = #tpu.pipeline_mode<synchronous>, transform_indices = @transform_5, window_bounds = array<i64: 128, 128>}, {pipeline_mode = #tpu.pipeline_mode<synchronous>, transform_indices = @transform_6, window_bounds = array<i64: 1, 128>}, {transform_indices = @transform_7, window_bounds = array<i64: 64, 128>}]} {
    %c0 = arith.constant 0 : index
    %c0_0 = arith.constant 0 : index
    %0 = vector.load %arg1[%c0, %c0_0] : memref<64x128xf32, #tpu.memory_space<vmem>>, vector<64x128xf32>
    %c0_1 = arith.constant 0 : index
    %c0_2 = arith.constant 0 : index
    %1 = vector.load %arg2[%c0_1, %c0_2] : memref<128x128xf32, #tpu.memory_space<vmem>>, vector<128x128xf32>
    %c0_3 = arith.constant 0 : index
    %c0_4 = arith.constant 0 : index
    %2 = vector.load %arg3[%c0_3, %c0_4] : memref<1x128xf32, #tpu.memory_space<vmem>>, vector<1x128xf32>
    %cst = arith.constant dense<0.000000e+00> : vector<64x128xf32>
    %3 = tpu.matmul %0, %1, %cst {dimension_numbers = #tpu.dot_dimension_numbers<[1], [0], [0], [1], [0, 0, 1, 1], [], []>} : vector<64x128xf32>, vector<128x128xf32>, vector<64x128xf32> -> vector<64x128xf32>
    %4 = vector.broadcast %2 : vector<1x128xf32> to vector<64x128xf32>
    %5 = arith.addf %3, %4 : vector<64x128xf32>
    %6 = math.tanh %5 : vector<64x128xf32>
    %c0_5 = arith.constant 0 : index
    %c0_6 = arith.constant 0 : index
    %7 = vector.load %arg4[%c0_5, %c0_6] : memref<128x128xf32, #tpu.memory_space<vmem>>, vector<128x128xf32>
    %c0_7 = arith.constant 0 : index
    %c0_8 = arith.constant 0 : index
    %8 = vector.load %arg5[%c0_7, %c0_8] : memref<1x128xf32, #tpu.memory_space<vmem>>, vector<1x128xf32>
    %cst_9 = arith.constant dense<0.000000e+00> : vector<64x128xf32>
    %9 = tpu.matmul %6, %7, %cst_9 {dimension_numbers = #tpu.dot_dimension_numbers<[1], [0], [0], [1], [0, 0, 1, 1], [], []>} : vector<64x128xf32>, vector<128x128xf32>, vector<64x128xf32> -> vector<64x128xf32>
    %10 = vector.broadcast %8 : vector<1x128xf32> to vector<64x128xf32>
    %11 = arith.addf %9, %10 : vector<64x128xf32>
    %12 = math.tanh %11 : vector<64x128xf32>
    %c0_10 = arith.constant 0 : index
    %c0_11 = arith.constant 0 : index
    %13 = vector.load %arg6[%c0_10, %c0_11] : memref<128x128xf32, #tpu.memory_space<vmem>>, vector<128x128xf32>
    %c0_12 = arith.constant 0 : index
    %c0_13 = arith.constant 0 : index
    %14 = vector.load %arg7[%c0_12, %c0_13] : memref<1x128xf32, #tpu.memory_space<vmem>>, vector<1x128xf32>
    %cst_14 = arith.constant dense<0.000000e+00> : vector<64x128xf32>
    %15 = tpu.matmul %12, %13, %cst_14 {dimension_numbers = #tpu.dot_dimension_numbers<[1], [0], [0], [1], [0, 0, 1, 1], [], []>} : vector<64x128xf32>, vector<128x128xf32>, vector<64x128xf32> -> vector<64x128xf32>
    %16 = vector.broadcast %14 : vector<1x128xf32> to vector<64x128xf32>
    %17 = arith.addf %15, %16 : vector<64x128xf32>
    %c0_15 = arith.constant 0 : index
    %c0_16 = arith.constant 0 : index
    %18 = vector.load %arg8[%c0_15, %c0_16] : memref<64x128xf32, #tpu.memory_space<vmem>>, vector<64x128xf32>
    tpu.vector_store %arg8[%c0_15, %c0_16], %17 {strides = array<i32>} : memref<64x128xf32, #tpu.memory_space<vmem>>, vector<64x128xf32>,
    return
  }
  func.func @transform_0(%arg0: i32) -> (i32, i32) {
    %c0_i32 = arith.constant 0 : i32
    %c0_i32_0 = arith.constant 0 : i32
    return %arg0, %c0_i32 : i32, i32
  }
  func.func @transform_1(%arg0: i32) -> (i32, i32) {
    %c0_i32 = arith.constant 0 : i32
    %c0_i32_0 = arith.constant 0 : i32
    %c0_i32_1 = arith.constant 0 : i32
    return %c0_i32, %c0_i32_0 : i32, i32
  }
  func.func @transform_2(%arg0: i32) -> (i32, i32) {
    %c0_i32 = arith.constant 0 : i32
    %c0_i32_0 = arith.constant 0 : i32
    %c0_i32_1 = arith.constant 0 : i32
    return %c0_i32, %c0_i32_0 : i32, i32
  }
  func.func @transform_3(%arg0: i32) -> (i32, i32) {
    %c0_i32 = arith.constant 0 : i32
    %c0_i32_0 = arith.constant 0 : i32
    %c0_i32_1 = arith.constant 0 : i32
    return %c0_i32, %c0_i32_0 : i32, i32
  }
  func.func @transform_4(%arg0: i32) -> (i32, i32) {
    %c0_i32 = arith.constant 0 : i32
    %c0_i32_0 = arith.constant 0 : i32
    %c0_i32_1 = arith.constant 0 : i32
    return %c0_i32, %c0_i32_0 : i32, i32
  }
  func.func @transform_5(%arg0: i32) -> (i32, i32) {
    %c0_i32 = arith.constant 0 : i32
    %c0_i32_0 = arith.constant 0 : i32
    %c0_i32_1 = arith.constant 0 : i32
    return %c0_i32, %c0_i32_0 : i32, i32
  }
  func.func @transform_6(%arg0: i32) -> (i32, i32) {
    %c0_i32 = arith.constant 0 : i32
    %c0_i32_0 = arith.constant 0 : i32
    %c0_i32_1 = arith.constant 0 : i32
    return %c0_i32, %c0_i32_0 : i32, i32
  }
  func.func @transform_7(%arg0: i32) -> (i32, i32) {
    %c0_i32 = arith.constant 0 : i32
    %c0_i32_0 = arith.constant 0 : i32
    return %arg0, %c0_i32 : i32, i32
  }
}

</mosaic_0001>

<llo_original>
// kernel: tpu_custom_call.1
$region0: #{tpu_custom_call.1}
  #allocation0 [shape = 'u32[]', space=smem, size = 0x4, offset = 0x4, fixed_abs, tag = 'smem constant byte address 0x4 - core index']
  #allocation1 [shape = 'u32[72,128]{1,0:T(1,128)}', space=vmem, size = 0x9000, scoped, tag = 'internal scratch']
  %s0 = inlined_call_operand.hbm [shape: f32[64,128], index: 0, kind: input, shape index: {}]
  %s1 = inlined_call_operand.hbm [shape: f32[128,128], index: 1, kind: input, shape index: {}]
  %s2 = inlined_call_operand.vmem [shape: f32[1,128], index: 2, kind: input, shape index: {}]
  %s3 = inlined_call_operand.hbm [shape: f32[128,128], index: 3, kind: input, shape index: {}]
  %s4 = inlined_call_operand.vmem [shape: f32[1,128], index: 4, kind: input, shape index: {}]
  %s5 = inlined_call_operand.hbm [shape: f32[128,128], index: 5, kind: input, shape index: {}]
  %s6 = inlined_call_operand.vmem [shape: f32[1,128], index: 6, kind: input, shape index: {}]
  %s7 = inlined_call_operand.hbm [shape: f32[64,128], index: 7, kind: output, shape index: {}]
  %s8 = sld [smem:[#allocation0]]
  $region54: #{tpu_custom_call.1} parent=0
    _
  %s10 = ssub.s32 1, %s8
  %s11 = scalar_select 0, %s10, %s8
  $region1: #{tpu_custom_call.1} parent=0
    #allocation2 [shape = 'u8[32768]{0}', space=vmem, size = 0x8000, scoped, tag = 'input window, operand 0, single buffered']
    #allocation3 [shape = 's32[1]{0}', space=sflag, size = 0x4, scoped, tag = 'scoped memory for tpu_custom_call.1']
    #allocation4 [shape = 's32[1]{0}', space=sflag, size = 0x4, scoped, tag = 'scoped memory for tpu_custom_call.1']
    #allocation5 [shape = 'u8[65536]{0}', space=vmem, size = 0x10000, scoped, tag = 'input window, operand 1, single buffered']
    #allocation6 [shape = 's32[1]{0}', space=sflag, size = 0x4, scoped, tag = 'scoped memory for tpu_custom_call.1']
    #allocation7 [shape = 'u8[65536]{0}', space=vmem, size = 0x10000, scoped, tag = 'input window, operand 3, single buffered']
    #allocation8 [shape = 'u8[65536]{0}', space=vmem, size = 0x10000, scoped, tag = 'input window, operand 5, single buffered']
    #allocation9 [shape = 's32[1]{0}', space=sflag, size = 0x4, scoped, tag = 'scoped memory for tpu_custom_call.1']
    #allocation10 [shape = 'u8[32768]{0}', space=vmem, size = 0x8000, scoped, tag = 'output window, operand 0, single buffered']
    %12 = vsyncpa [#allocation3], 0
    %13 = vsyncpa [#allocation6], 0
    %14 = vsyncpa [#allocation9], 0
    %15 = vsyncpa [#allocation4], 0
    // Predicated region
    $region2: #{tpu_custom_call.1} parent=1 // pred_check
      _
    $region3: #{tpu_custom_call.1} parent=1 // pred_check_branch
      %17 = sbr.rel (0) target = $region5
    $region4: #{tpu_custom_call.1} parent=1 // pred_region
      %19 = vsyncadd [#allocation3], 0
      %s20 = sshll.u32 %s0, 4
      %s21 = int_to_ptr.hbm [resolvable:$true] %s20
      %s22 = sshll.u32 [#allocation2], 4
      %s23 = int_to_ptr.vmem [resolvable:$true] %s22
      %28 = dma.hbm_to_vmem [thread:$0]  %s21, 1024, %s23, [#allocation3], 128, 128, 8
    $region5: #{tpu_custom_call.1} parent=1 // pred_fallthru
      _
    // Predicated region
    $region6: #{tpu_custom_call.1} parent=1 // pred_check
      _
    $region7: #{tpu_custom_call.1} parent=1 // pred_check_branch
      %30 = sbr.rel (0) target = $region9
    $region8: #{tpu_custom_call.1} parent=1 // pred_region
      %32 = vsyncadd [#allocation6], 0
      %s33 = sshll.u32 %s1, 4
      %s34 = int_to_ptr.hbm [resolvable:$true] %s33
      %s35 = sshll.u32 [#allocation5], 4
      %s36 = int_to_ptr.vmem [resolvable:$true] %s35
      %41 = dma.hbm_to_vmem [thread:$0]  %s34, 2048, %s36, [#allocation6], 128, 128, 8
    $region9: #{tpu_custom_call.1} parent=1 // pred_fallthru
      _
    // Predicated region
    $region10: #{tpu_custom_call.1} parent=1 // pred_check
      _
    $region11: #{tpu_custom_call.1} parent=1 // pred_check_branch
      %43 = sbr.rel (0) target = $region13
    $region12: #{tpu_custom_call.1} parent=1 // pred_region
      _
    $region13: #{tpu_custom_call.1} parent=1 // pred_fallthru
      _
    // Predicated region
    $region14: #{tpu_custom_call.1} parent=1 // pred_check
      _
    $region15: #{tpu_custom_call.1} parent=1 // pred_check_branch
      %45 = sbr.rel (0) target = $region17
    $region16: #{tpu_custom_call.1} parent=1 // pred_region
      %47 = vsyncadd [#allocation6], 0
      %s48 = sshll.u32 %s3, 4
      %s49 = int_to_ptr.hbm [resolvable:$true] %s48
      %s50 = sshll.u32 [#allocation7], 4
      %s51 = int_to_ptr.vmem [resolvable:$true] %s50
      %56 = dma.hbm_to_vmem [thread:$0]  %s49, 2048, %s51, [#allocation6], 128, 128, 8
    $region17: #{tpu_custom_call.1} parent=1 // pred_fallthru
      _
    // Predicated region
    $region18: #{tpu_custom_call.1} parent=1 // pred_check
      _
    $region19: #{tpu_custom_call.1} parent=1 // pred_check_branch
      %58 = sbr.rel (0) target = $region21
    $region20: #{tpu_custom_call.1} parent=1 // pred_region
      _
    $region21: #{tpu_custom_call.1} parent=1 // pred_fallthru
      _
    // Predicated region
    $region22: #{tpu_custom_call.1} parent=1 // pred_check
      _
    $region23: #{tpu_custom_call.1} parent=1 // pred_check_branch
      %60 = sbr.rel (0) target = $region25
    $region24: #{tpu_custom_call.1} parent=1 // pred_region
      %62 = vsyncadd [#allocation9], 0
      %s63 = sshll.u32 %s5, 4
      %s64 = int_to_ptr.hbm [resolvable:$true] %s63
      %s65 = sshll.u32 [#allocation8], 4
      %s66 = int_to_ptr.vmem [resolvable:$true] %s65
      %71 = dma.hbm_to_vmem [thread:$0]  %s64, 2048, %s66, [#allocation9], 128, 128, 8
    $region25: #{tpu_custom_call.1} parent=1 // pred_fallthru
      _
    // Predicated region
    $region26: #{tpu_custom_call.1} parent=1 // pred_check
      _
    $region27: #{tpu_custom_call.1} parent=1 // pred_check_branch
      %73 = sbr.rel (0) target = $region29
    $region28: #{tpu_custom_call.1} parent=1 // pred_region
      _
    $region29: #{tpu_custom_call.1} parent=1 // pred_fallthru
      _
    // Predicated region
    $region30: #{tpu_custom_call.1} parent=1 // pred_check
      _
    $region31: #{tpu_custom_call.1} parent=1 // pred_check_branch
      %75 = sbr.rel (0) target = $region33
    $region32: #{tpu_custom_call.1} parent=1 // pred_region
      %77 = dma.done [#allocation3], 1024
    $region33: #{tpu_custom_call.1} parent=1 // pred_fallthru
      _
    // Predicated region
    $region34: #{tpu_custom_call.1} parent=1 // pred_check
      _
    $region35: #{tpu_custom_call.1} parent=1 // pred_check_branch
      %79 = sbr.rel (0) target = $region37
    $region36: #{tpu_custom_call.1} parent=1 // pred_region
      %81 = dma.done [#allocation6], 2048
    $region37: #{tpu_custom_call.1} parent=1 // pred_fallthru
      _
    // Predicated region
    $region38: #{tpu_custom_call.1} parent=1 // pred_check
      _
    $region39: #{tpu_custom_call.1} parent=1 // pred_check_branch
      %83 = sbr.rel (0) target = $region41
    $region40: #{tpu_custom_call.1} parent=1 // pred_region
      %85 = dma.done [#allocation6], 2048
    $region41: #{tpu_custom_call.1} parent=1 // pred_fallthru
      _
    // Predicated region
    $region42: #{tpu_custom_call.1} parent=1 // pred_check
      _
    $region43: #{tpu_custom_call.1} parent=1 // pred_check_branch
      %87 = sbr.rel (0) target = $region45
    $region44: #{tpu_custom_call.1} parent=1 // pred_region
      %89 = dma.done [#allocation9], 2048
    $region45: #{tpu_custom_call.1} parent=1 // pred_fallthru
      _
    %v90 = vld [vmem:[#allocation2] sm:$0xff]
    %v91 = vld [vmem:[#allocation2 + $0x8] sm:$0xff]
    %v92 = vld [vmem:[#allocation2 + $0x10] sm:$0xff]
    %v93 = vld [vmem:[#allocation2 + $0x18] sm:$0xff]
    %v94 = vld [vmem:[#allocation2 + $0x20] sm:$0xff]
    %v95 = vld [vmem:[#allocation2 + $0x28] sm:$0xff]
    %v96 = vld [vmem:[#allocation2 + $0x30] sm:$0xff]
    %v97 = vld [vmem:[#allocation2 + $0x38] sm:$0xff]
    %v98 = vld [vmem:[#allocation5] sm:$0xff]
    %v99 = vld [vmem:[#allocation5 + $0x8] sm:$0xff]
    %v100 = vld [vmem:[#allocation5 + $0x10] sm:$0xff]
    %v101 = vld [vmem:[#allocation5 + $0x18] sm:$0xff]
    %v102 = vld [vmem:[#allocation5 + $0x20] sm:$0xff]
    %v103 = vld [vmem:[#allocation5 + $0x28] sm:$0xff]
    %v104 = vld [vmem:[#allocation5 + $0x30] sm:$0xff]
    %v105 = vld [vmem:[#allocation5 + $0x38] sm:$0xff]
    %v106 = vld [vmem:[#allocation5 + $0x40] sm:$0xff]
    %v107 = vld [vmem:[#allocation5 + $0x48] sm:$0xff]
    %v108 = vld [vmem:[#allocation5 + $0x50] sm:$0xff]
    %v109 = vld [vmem:[#allocation5 + $0x58] sm:$0xff]
    %v110 = vld [vmem:[#allocation5 + $0x60] sm:$0xff]
    %v111 = vld [vmem:[#allocation5 + $0x68] sm:$0xff]
    %v112 = vld [vmem:[#allocation5 + $0x70] sm:$0xff]
    %v113 = vld [vmem:[#allocation5 + $0x78] sm:$0xff]
    %v114 = vld [vmem:[%s2] sm:$0x1]
    %v116 = vperm.slane %v114, 0
    %118 = vmatpush.msra.mxu0 %v113
    %119 = vmatpush.msra.mxu0 %v112
    %120 = vmatpush.msra.mxu0 %v111
    %121 = vmatpush.msra.mxu0 %v110
    %122 = vmatpush.msra.mxu0 %v109
    %123 = vmatpush.msra.mxu0 %v108
    %124 = vmatpush.msra.mxu0 %v107
    %125 = vmatpush.msra.mxu0 %v106
    %126 = vmatpush.msra.mxu0 %v105
    %127 = vmatpush.msra.mxu0 %v104
    %128 = vmatpush.msra.mxu0 %v103
    %129 = vmatpush.msra.mxu0 %v102
    %130 = vmatpush.msra.mxu0 %v101
    %131 = vmatpush.msra.mxu0 %v100
    %132 = vmatpush.msra.mxu0 %v99
    %133 = vmatpush.msra.mxu0 %v98
    %134 = vmatmul.f32.gmra.mxu0 %v90
    %v135 = vpop.f32.mrf.mxu0
    %v136 = vadd.f32 %v116, %v135
    %137 = vmatmul.f32.gmra.mxu0 %v91
    %v138 = vpop.f32.mrf.mxu0
    %v139 = vadd.f32 %v116, %v138
    %140 = vmatmul.f32.gmra.mxu0 %v92
    %v141 = vpop.f32.mrf.mxu0
    %v142 = vadd.f32 %v116, %v141
    %143 = vmatmul.f32.gmra.mxu0 %v93
    %v144 = vpop.f32.mrf.mxu0
    %v145 = vadd.f32 %v116, %v144
    %146 = vmatmul.f32.gmra.mxu0 %v94
    %v147 = vpop.f32.mrf.mxu0
    %v148 = vadd.f32 %v116, %v147
    %149 = vmatmul.f32.gmra.mxu0 %v95
    %v150 = vpop.f32.mrf.mxu0
    %v151 = vadd.f32 %v116, %v150
    %152 = vmatmul.f32.gmra.mxu0 %v96
    %v153 = vpop.f32.mrf.mxu0
    %v154 = vadd.f32 %v116, %v153
    %155 = vmatmul.f32.gmra.mxu0 %v97
    %v156 = vpop.f32.mrf.mxu0
    %v157 = vadd.f32 %v116, %v156
    %158 = vdwg.mxu0
    %v159 = vtanh.pop %v136
    %v160 = vtanh.pop %v139
    %v161 = vtanh.pop %v142
    %v162 = vtanh.pop %v145
    %v163 = vtanh.pop %v148
    %v164 = vtanh.pop %v151
    %v165 = vtanh.pop %v154
    %v166 = vtanh.pop %v157
    %v167 = vld [vmem:[#allocation7] sm:$0xff]
    %v168 = vld [vmem:[#allocation7 + $0x8] sm:$0xff]
    %v169 = vld [vmem:[#allocation7 + $0x10] sm:$0xff]
    %v170 = vld [vmem:[#allocation7 + $0x18] sm:$0xff]
    %v171 = vld [vmem:[#allocation7 + $0x20] sm:$0xff]
    %v172 = vld [vmem:[#allocation7 + $0x28] sm:$0xff]
    %v173 = vld [vmem:[#allocation7 + $0x30] sm:$0xff]
    %v174 = vld [vmem:[#allocation7 + $0x38] sm:$0xff]
    %v175 = vld [vmem:[#allocation7 + $0x40] sm:$0xff]
    %v176 = vld [vmem:[#allocation7 + $0x48] sm:$0xff]
    %v177 = vld [vmem:[#allocation7 + $0x50] sm:$0xff]
    %v178 = vld [vmem:[#allocation7 + $0x58] sm:$0xff]
    %v179 = vld [vmem:[#allocation7 + $0x60] sm:$0xff]
    %v180 = vld [vmem:[#allocation7 + $0x68] sm:$0xff]
    %v181 = vld [vmem:[#allocation7 + $0x70] sm:$0xff]
    %v182 = vld [vmem:[#allocation7 + $0x78] sm:$0xff]
    %v183 = vld [vmem:[%s4] sm:$0x1]
    %v185 = vperm.slane %v183, 0
    %187 = vmatpush.msra.mxu0 %v182
    %188 = vmatpush.msra.mxu0 %v181
    %189 = vmatpush.msra.mxu0 %v180
    %190 = vmatpush.msra.mxu0 %v179
    %191 = vmatpush.msra.mxu0 %v178
    %192 = vmatpush.msra.mxu0 %v177
    %193 = vmatpush.msra.mxu0 %v176
    %194 = vmatpush.msra.mxu0 %v175
    %195 = vmatpush.msra.mxu0 %v174
    %196 = vmatpush.msra.mxu0 %v173
    %197 = vmatpush.msra.mxu0 %v172
    %198 = vmatpush.msra.mxu0 %v171
    %199 = vmatpush.msra.mxu0 %v170
    %200 = vmatpush.msra.mxu0 %v169
    %201 = vmatpush.msra.mxu0 %v168
    %202 = vmatpush.msra.mxu0 %v167
    %203 = vmatmul.f32.gmra.mxu0 %v159
    %v204 = vpop.f32.mrf.mxu0
    %v205 = vadd.f32 %v185, %v204
    %206 = vmatmul.f32.gmra.mxu0 %v160
    %v207 = vpop.f32.mrf.mxu0
    %v208 = vadd.f32 %v185, %v207
    %209 = vmatmul.f32.gmra.mxu0 %v161
    %v210 = vpop.f32.mrf.mxu0
    %v211 = vadd.f32 %v185, %v210
    %212 = vmatmul.f32.gmra.mxu0 %v162
    %v213 = vpop.f32.mrf.mxu0
    %v214 = vadd.f32 %v185, %v213
    %215 = vmatmul.f32.gmra.mxu0 %v163
    %v216 = vpop.f32.mrf.mxu0
    %v217 = vadd.f32 %v185, %v216
    %218 = vmatmul.f32.gmra.mxu0 %v164
    %v219 = vpop.f32.mrf.mxu0
    %v220 = vadd.f32 %v185, %v219
    %221 = vmatmul.f32.gmra.mxu0 %v165
    %v222 = vpop.f32.mrf.mxu0
    %v223 = vadd.f32 %v185, %v222
    %224 = vmatmul.f32.gmra.mxu0 %v166
    %v225 = vpop.f32.mrf.mxu0
    %v226 = vadd.f32 %v185, %v225
    %227 = vdwg.mxu0
    %v228 = vtanh.pop %v205
    %v229 = vtanh.pop %v208
    %v230 = vtanh.pop %v211
    %v231 = vtanh.pop %v214
    %v232 = vtanh.pop %v217
    %v233 = vtanh.pop %v220
    %v234 = vtanh.pop %v223
    %v235 = vtanh.pop %v226
    %v236 = vld [vmem:[#allocation8] sm:$0xff]
    %v237 = vld [vmem:[#allocation8 + $0x8] sm:$0xff]
    %v238 = vld [vmem:[#allocation8 + $0x10] sm:$0xff]
    %v239 = vld [vmem:[#allocation8 + $0x18] sm:$0xff]
    %v240 = vld [vmem:[#allocation8 + $0x20] sm:$0xff]
    %v241 = vld [vmem:[#allocation8 + $0x28] sm:$0xff]
    %v242 = vld [vmem:[#allocation8 + $0x30] sm:$0xff]
    %v243 = vld [vmem:[#allocation8 + $0x38] sm:$0xff]
    %v244 = vld [vmem:[#allocation8 + $0x40] sm:$0xff]
    %v245 = vld [vmem:[#allocation8 + $0x48] sm:$0xff]
    %v246 = vld [vmem:[#allocation8 + $0x50] sm:$0xff]
    %v247 = vld [vmem:[#allocation8 + $0x58] sm:$0xff]
    %v248 = vld [vmem:[#allocation8 + $0x60] sm:$0xff]
    %v249 = vld [vmem:[#allocation8 + $0x68] sm:$0xff]
    %v250 = vld [vmem:[#allocation8 + $0x70] sm:$0xff]
    %v251 = vld [vmem:[#allocation8 + $0x78] sm:$0xff]
    %v252 = vld [vmem:[%s6] sm:$0x1]
    %v254 = vperm.slane %v252, 0
    %256 = vmatpush.msra.mxu0 %v251
    %257 = vmatpush.msra.mxu0 %v250
    %258 = vmatpush.msra.mxu0 %v249
    %259 = vmatpush.msra.mxu0 %v248
    %260 = vmatpush.msra.mxu0 %v247
    %261 = vmatpush.msra.mxu0 %v246
    %262 = vmatpush.msra.mxu0 %v245
    %263 = vmatpush.msra.mxu0 %v244
    %264 = vmatpush.msra.mxu0 %v243
    %265 = vmatpush.msra.mxu0 %v242
    %266 = vmatpush.msra.mxu0 %v241
    %267 = vmatpush.msra.mxu0 %v240
    %268 = vmatpush.msra.mxu0 %v239
    %269 = vmatpush.msra.mxu0 %v238
    %270 = vmatpush.msra.mxu0 %v237
    %271 = vmatpush.msra.mxu0 %v236
    %272 = vmatmul.f32.gmra.mxu0 %v228
    %v273 = vpop.f32.mrf.mxu0
    %v274 = vadd.f32 %v254, %v273
    %275 = vmatmul.f32.gmra.mxu0 %v229
    %v276 = vpop.f32.mrf.mxu0
    %v277 = vadd.f32 %v254, %v276
    %278 = vmatmul.f32.gmra.mxu0 %v230
    %v279 = vpop.f32.mrf.mxu0
    %v280 = vadd.f32 %v254, %v279
    %281 = vmatmul.f32.gmra.mxu0 %v231
    %v282 = vpop.f32.mrf.mxu0
    %v283 = vadd.f32 %v254, %v282
    %284 = vmatmul.f32.gmra.mxu0 %v232
    %v285 = vpop.f32.mrf.mxu0
    %v286 = vadd.f32 %v254, %v285
    %287 = vmatmul.f32.gmra.mxu0 %v233
    %v288 = vpop.f32.mrf.mxu0
    %v289 = vadd.f32 %v254, %v288
    %290 = vmatmul.f32.gmra.mxu0 %v234
    %v291 = vpop.f32.mrf.mxu0
    %v292 = vadd.f32 %v254, %v291
    %293 = vmatmul.f32.gmra.mxu0 %v235
    %v294 = vpop.f32.mrf.mxu0
    %v295 = vadd.f32 %v254, %v294
    %296 = vdwg.mxu0
    %297 = vst [vmem:[#allocation10] sm:$0xff] %v274
    %298 = vst [vmem:[#allocation10 + $0x8] sm:$0xff] %v277
    %299 = vst [vmem:[#allocation10 + $0x10] sm:$0xff] %v280
    %300 = vst [vmem:[#allocation10 + $0x18] sm:$0xff] %v283
    %301 = vst [vmem:[#allocation10 + $0x20] sm:$0xff] %v286
    %302 = vst [vmem:[#allocation10 + $0x28] sm:$0xff] %v289
    %303 = vst [vmem:[#allocation10 + $0x30] sm:$0xff] %v292
    %304 = vst [vmem:[#allocation10 + $0x38] sm:$0xff] %v295
    // Predicated region
    $region46: #{tpu_custom_call.1} parent=1 // pred_check
      _
    $region47: #{tpu_custom_call.1} parent=1 // pred_check_branch
      %306 = sbr.rel (0) target = $region49
    $region48: #{tpu_custom_call.1} parent=1 // pred_region
      %308 = vsyncadd [#allocation4], 0
      %s309 = sshll.u32 [#allocation10], 4
      %s310 = int_to_ptr.vmem [resolvable:$true] %s309
      %s311 = sshll.u32 %s7, 4
      %s312 = int_to_ptr.hbm [resolvable:$true] %s311
      %317 = dma.vmem_to_hbm [thread:$0]  %s310, 1024, %s312, [#allocation4], 128, 128, 8
    $region49: #{tpu_custom_call.1} parent=1 // pred_fallthru
      _
    // Predicated region
    $region50: #{tpu_custom_call.1} parent=1 // pred_check
      _
    $region51: #{tpu_custom_call.1} parent=1 // pred_check_branch
      %319 = sbr.rel (0) target = $region53
    $region52: #{tpu_custom_call.1} parent=1 // pred_region
      %321 = dma.done [#allocation4], 1024
    $region53: #{tpu_custom_call.1} parent=1 // pred_fallthru
      _
    %322 = vsyncpa [#allocation3], 1
    %323 = vsyncpa [#allocation6], 1
    %324 = vsyncpa [#allocation9], 1
    %325 = vsyncpa [#allocation4], 1

</llo_original>
